<compile_context>
chip_gen: v7x
topology: tpu7x:2x2x1
jax: 0.10.0
libtpu: 0.0.40
codegen_flags: <defaults>
</compile_context>

<pallas_src>
import math

import numpy as np
import jax
import jax.numpy as jnp
from jax.experimental import pallas as pl
from jax.experimental.pallas import tpu as pltpu

_SUBLANE = 8
_LANE = 128


def _softplus(y):
    # Matches torch.nn.Softplus(beta=1, threshold=20).
    # NOTE: the jnp.minimum clamp is what keeps the masked blend in the kernel
    # NaN-free (unmasked lanes with y > 20 would otherwise hit inf * 0 = NaN).
    return jnp.where(y > 20.0, y, jnp.log1p(jnp.exp(jnp.minimum(y, 20.0))))


def _round_up(x, m):
    return ((x + m - 1) // m) * m


# ----------------------------------------------------------------------------- kernel
def _diw_kernel(x_ref, w_ref, aux_ref, o_ref):
    # Fused matmul in f32 (HBM-bound kernel -> f32 MXU cost is irrelevant).
    y = jnp.dot(x_ref[...], w_ref[...], preferred_element_type=jnp.float32)
    bias = aux_ref[0:1, :]   # (1, D_pad)
    mask = aux_ref[1:2, :]   # (1, D_pad) 1.0 where softplus applies
    off = aux_ref[2:3, :]    # (1, D_pad) additive offset after softplus
    y = y + bias
    sp = _softplus(y)
    # Algebraic blend (pure VPU broadcast math): mask==1 -> sp + off, else y.
    o_ref[...] = y + mask * (sp + off - y)


# ----------------------------------------------------------------------------- params
def build_fused_params(w_mu, b_mu, w_params, b_params, w_L, b_L, p):
    """One-time fusion of the three Linear layers + column metadata.

    Column layout already includes the L scatter: vec(L) positions that are
    strictly upper-triangular map to all-zero weight/bias columns, so the
    kernel output can simply be reshaped to (B, p, p).
    """
    w_mu = np.asarray(w_mu, np.float32)
    b_mu = np.asarray(b_mu, np.float32)
    w_params = np.asarray(w_params, np.float32)
    b_params = np.asarray(b_params, np.float32)
    w_L = np.asarray(w_L, np.float32)
    b_L = np.asarray(b_L, np.float32)

    F = w_mu.shape[1]
    D = p + 2 + p * p
    D_pad = _round_up(D, _LANE)

    W = np.zeros((F, D_pad), np.float32)
    b = np.zeros((D_pad,), np.float32)
    mask = np.zeros((D_pad,), np.float32)
    off = np.zeros((D_pad,), np.float32)

    # PyTorch Linear: y = x @ W.T + b
    W[:, :p] = w_mu.T
    b[:p] = b_mu
    W[:, p:p + 2] = w_params.T
    b[p:p + 2] = b_params
    mask[p] = 1.0
    off[p] = float(p + 1)          # nu = softplus(lognu) + p + 1
    mask[p + 1] = 1.0
    off[p + 1] = 1.0               # kappa = softplus(logkappa) + 1

    # torch.tril_indices(p, p) order: (0,0),(1,0),(1,1),(2,0),... (row-major).
    t = 0
    for i in range(p):
        for j in range(i + 1):
            col = p + 2 + i * p + j
            W[:, col] = w_L[t, :]
            b[col] = b_L[t]
            if i == j:
                mask[col] = 1.0    # diag of L -> softplus, no offset
            t += 1

    aux = np.stack([b, mask, off], axis=0)   # (3, D_pad)
    return dict(W=jnp.asarray(W), aux=jnp.asarray(aux),
                p=p, F=F, D=D, D_pad=D_pad)


# ----------------------------------------------------------------------------- tiling
def _vmem_budget_bytes():
    cap = None
    try:
        info = pltpu.get_tpu_info()
        cap = getattr(info, "vmem_capacity_bytes", None)
    except Exception:
        cap = None
    if cap is None:
        cap = 64 * 1024 * 1024   # assume smallest (v7x per-TC) when unknown
    return min(int(cap * 3) // 4, 96 * 1024 * 1024)


def _choose_tb(B, F, D_pad, vmem_budget):
    # Conservative double-buffered accounting for x/out tiles and the
    # grid-invariant W/aux blocks (all f32).
    fixed = 2 * (F * D_pad + 3 * D_pad) * 4
    per_row = 2 * (F + D_pad) * 4
    avail = max(vmem_budget - fixed, per_row * _SUBLANE)
    tb_cap = max(_SUBLANE, (avail // per_row) // _SUBLANE * _SUBLANE)
    # Force >= 2 grid steps so the "parallel" axis shards across v7x's 2 TCs.
    tb_half = _round_up(max(pl.cdiv(B, 2), 1), _SUBLANE)
    return int(max(_SUBLANE, min(tb_cap, tb_half, 4096)))


# ----------------------------------------------------------------------------- forward
def dense_inverse_wishart_forward(x, fused, mu_activation=None,
                                  min_pallas_batch=128):
    """Returns (mu, nu, kappa, L) matching the PyTorch module semantics."""
    x = x.astype(jnp.float32)
    B, F = x.shape
    assert F == fused["F"]
    p, D_pad = fused["p"], fused["D_pad"]
    W, aux = fused["W"], fused["aux"]

    if B < min_pallas_batch:
        # Small-batch fallback: same fused math as the kernel, no launch/pad
        # overhead for tiny B.
        y = x @ W + aux[0]
        y = y + aux[1] * (_softplus(y) + aux[2] - y)
    else:
        budget = _vmem_budget_bytes()
        TB = _choose_tb(B, F, D_pad, budget)
        nb = pl.cdiv(B, TB)
        y = pl.pallas_call(
            _diw_kernel,
            out_shape=jax.ShapeDtypeStruct((B, D_pad), jnp.float32),
            grid=(nb,),
            in_specs=[
                pl.BlockSpec((TB, F), lambda i: (i, 0)),       # x tile (pipelined)
                pl.BlockSpec((F, D_pad), lambda i: (0, 0)),    # fused W (invariant)
                pl.BlockSpec((3, D_pad), lambda i: (0, 0)),    # bias/mask/off
            ],
            out_specs=pl.BlockSpec((TB, D_pad), lambda i: (i, 0)),
            compiler_params=pltpu.CompilerParams(
                dimension_semantics=("parallel",),
                vmem_limit_bytes=int(budget)),
        )(x, W, aux)

    mu = y[:, :p]
    nu = y[:, p:p + 1]
    kappa = y[:, p + 1:p + 2]
    L = y[:, p + 2:p + 2 + p * p].reshape(B, p, p)
    if mu_activation is not None:
        mu = mu_activation(mu)
    return mu, nu, kappa, L


# ----------------------------------------------------------------------------- reference
def _reference(x, w_mu, b_mu, w_params, b_params, w_L, b_L, p):
    """Plain-JAX f32 reference mirroring the PyTorch forward."""
    def softplus(v):
        return jnp.where(v > 20.0, v, jnp.log1p(jnp.exp(jnp.minimum(v, 20.0))))
    mu = x @ w_mu.T + b_mu
    params = x @ w_params.T + b_params
    lognu, logkappa = params[:, 0:1], params[:, 1:2]
    nu = softplus(lognu) + p + 1
    kappa = softplus(logkappa) + 1
    nz = x @ w_L.T + b_L
    rows, cols = [], []
    for i in range(p):
        for j in range(i + 1):
            rows.append(i)
            cols.append(j)
    L = jnp.zeros((x.shape[0], p, p), jnp.float32)
    L = L.at[:, jnp.asarray(rows), jnp.asarray(cols)].set(nz)
    diag = jnp.arange(p)
    L = L.at[:, diag, diag].set(softplus(L[:, diag, diag]))
    return mu, nu, kappa, L


if __name__ == "__main__":
    p, F = 3, 32
    n_tril = (p * (p + 1)) // 2

    key = jax.random.PRNGKey(0)
    k = jax.random.split(key, 8)
    bound = 1.0 / math.sqrt(F)
    w_mu = jax.random.uniform(k[0], (p, F), jnp.float32, -bound, bound)
    b_mu = jax.random.uniform(k[1], (p,), jnp.float32, -bound, bound)
    w_params = jax.random.uniform(k[2], (2, F), jnp.float32, -bound, bound)
    b_params = jax.random.uniform(k[3], (2,), jnp.float32, -bound, bound)
    w_L = jax.random.uniform(k[4], (n_tril, F), jnp.float32, -bound, bound)
    b_L = jax.random.uniform(k[5], (n_tril,), jnp.float32, -bound, bound)

    fused = build_fused_params(w_mu, b_mu, w_params, b_params, w_L, b_L, p)

    ok = True
    tol = dict(atol=1e-4, rtol=1e-4)   # f32 matmul end to end
    for B, kx in ((256, k[6]), (8, k[7])):   # 256 -> Pallas path, 8 -> fallback
        x = jax.random.normal(kx, (B, F), jnp.float32)
        mu, nu, kappa, L = dense_inverse_wishart_forward(x, fused)
        jax.block_until_ready((mu, nu, kappa, L))

        mu_r, nu_r, kappa_r, L_r = _reference(
            x, w_mu, b_mu, w_params, b_params, w_L, b_L, p)
        ok &= bool(jnp.allclose(mu, mu_r, **tol))
        ok &= bool(jnp.allclose(nu, nu_r, **tol))
        ok &= bool(jnp.allclose(kappa, kappa_r, **tol))
        ok &= bool(jnp.allclose(L, L_r, **tol))
        ok &= (mu.shape == (B, p) and nu.shape == (B, 1)
               and kappa.shape == (B, 1) and L.shape == (B, p, p))

    assert ok, "mismatch vs reference"
    print("KERNEL_OK")
</pallas_src>

<mosaic_0001>
module attributes {stable_mosaic.version = 11 : i64} {
  func.func @_diw_kernel(%arg0: i32, %arg1: memref<128x32xf32, #tpu.memory_space<vmem>>, %arg2: memref<32x128xf32, #tpu.memory_space<vmem>>, %arg3: memref<3x128xf32, #tpu.memory_space<vmem>>, %arg4: memref<128x128xf32, #tpu.memory_space<vmem>>) attributes {dimension_semantics = [#tpu.dimension_semantics<parallel>], iteration_bounds = array<i64: 2>, scalar_prefetch = 0 : i64, scratch_operands = 0 : i64, tpu.core_type = #tpu.core_type<tc>, window_params = [{transform_indices = @transform_0, window_bounds = array<i64: 128, 32>}, {pipeline_mode = #tpu.pipeline_mode<synchronous>, transform_indices = @transform_1, window_bounds = array<i64: 32, 128>}, {pipeline_mode = #tpu.pipeline_mode<synchronous>, transform_indices = @transform_2, window_bounds = array<i64: 3, 128>}, {transform_indices = @transform_3, window_bounds = array<i64: 128, 128>}]} {
    %c0 = arith.constant 0 : index
    %c0_0 = arith.constant 0 : index
    %0 = vector.load %arg1[%c0, %c0_0] : memref<128x32xf32, #tpu.memory_space<vmem>>, vector<128x32xf32>
    %c0_1 = arith.constant 0 : index
    %c0_2 = arith.constant 0 : index
    %1 = vector.load %arg2[%c0_1, %c0_2] : memref<32x128xf32, #tpu.memory_space<vmem>>, vector<32x128xf32>
    %cst = arith.constant dense<0.000000e+00> : vector<128x128xf32>
    %2 = tpu.matmul %0, %1, %cst {dimension_numbers = #tpu.dot_dimension_numbers<[1], [0], [0], [1], [0, 0, 1, 1], [], []>} : vector<128x32xf32>, vector<32x128xf32>, vector<128x128xf32> -> vector<128x128xf32>
    %c0_3 = arith.constant 0 : index
    %c0_4 = arith.constant 0 : index
    %3 = vector.load %arg3[%c0_3, %c0_4] : memref<3x128xf32, #tpu.memory_space<vmem>>, vector<1x128xf32>
    %c1 = arith.constant 1 : index
    %c0_5 = arith.constant 0 : index
    %4 = vector.load %arg3[%c1, %c0_5] : memref<3x128xf32, #tpu.memory_space<vmem>>, vector<1x128xf32>
    %c2 = arith.constant 2 : index
    %c0_6 = arith.constant 0 : index
    %5 = vector.load %arg3[%c2, %c0_6] : memref<3x128xf32, #tpu.memory_space<vmem>>, vector<1x128xf32>
    %6 = vector.broadcast %3 : vector<1x128xf32> to vector<128x128xf32>
    %7 = arith.addf %2, %6 : vector<128x128xf32>
    %cst_7 = arith.constant 2.000000e+01 : f32
    %8 = vector.broadcast %cst_7 : f32 to vector<128x128xf32>
    %9 = arith.cmpf ogt, %7, %8 : vector<128x128xf32>
    %cst_8 = arith.constant 2.000000e+01 : f32
    %10 = vector.broadcast %cst_8 : f32 to vector<128x128xf32>
    %11 = arith.minimumf %7, %10 : vector<128x128xf32>
    %12 = math.exp %11 : vector<128x128xf32>
    %13 = math.log1p %12 : vector<128x128xf32>
    %14 = arith.select %9, %7, %13 : vector<128x128xi1>, vector<128x128xf32>
    %15 = vector.broadcast %5 : vector<1x128xf32> to vector<128x128xf32>
    %16 = arith.addf %14, %15 : vector<128x128xf32>
    %17 = arith.subf %16, %7 : vector<128x128xf32>
    %18 = vector.broadcast %4 : vector<1x128xf32> to vector<128x128xf32>
    %19 = arith.mulf %18, %17 : vector<128x128xf32>
    %20 = arith.addf %7, %19 : vector<128x128xf32>
    %c0_9 = arith.constant 0 : index
    %c0_10 = arith.constant 0 : index
    %21 = vector.load %arg4[%c0_9, %c0_10] : memref<128x128xf32, #tpu.memory_space<vmem>>, vector<128x128xf32>
    tpu.vector_store %arg4[%c0_9, %c0_10], %20 {strides = array<i32>} : memref<128x128xf32, #tpu.memory_space<vmem>>, vector<128x128xf32>,
    return
  }
  func.func @transform_0(%arg0: i32) -> (i32, i32) {
    %c0_i32 = arith.constant 0 : i32
    %c0_i32_0 = arith.constant 0 : i32
    return %arg0, %c0_i32 : i32, i32
  }
  func.func @transform_1(%arg0: i32) -> (i32, i32) {
    %c0_i32 = arith.constant 0 : i32
    %c0_i32_0 = arith.constant 0 : i32
    %c0_i32_1 = arith.constant 0 : i32
    return %c0_i32, %c0_i32_0 : i32, i32
  }
  func.func @transform_2(%arg0: i32) -> (i32, i32) {
    %c0_i32 = arith.constant 0 : i32
    %c0_i32_0 = arith.constant 0 : i32
    %c0_i32_1 = arith.constant 0 : i32
    return %c0_i32, %c0_i32_0 : i32, i32
  }
  func.func @transform_3(%arg0: i32) -> (i32, i32) {
    %c0_i32 = arith.constant 0 : i32
    %c0_i32_0 = arith.constant 0 : i32
    return %arg0, %c0_i32 : i32, i32
  }
}

</mosaic_0001>

<llo_original>
// kernel: tpu_custom_call.1
$region0: #{tpu_custom_call.1}
  #allocation0 [shape = 'u32[]', space=smem, size = 0x4, offset = 0x4, fixed_abs, tag = 'smem constant byte address 0x4 - core index']
  #allocation1 [shape = 'u32[144,128]{1,0:T(1,128)}', space=vmem, size = 0x12000, scoped, tag = 'internal scratch']
  %s0 = inlined_call_operand.vmem [shape: f32[256,32], index: 0, kind: input, shape index: {}]
  %s1 = inlined_call_operand.vmem [shape: f32[32,128], index: 1, kind: input, shape index: {}]
  %s2 = inlined_call_operand.vmem [shape: f32[3,128], index: 2, kind: input, shape index: {}]
  %s3 = inlined_call_operand.hbm [shape: f32[256,128], index: 3, kind: output, shape index: {}]
  %s4 = sld [smem:[#allocation0]]
  $region45: #{tpu_custom_call.1} parent=0
    _
  %s6 = ssub.s32 1, %s4
  %s7 = scalar_select 0, %s6, %s4
  $region1: #{tpu_custom_call.1} parent=0
    #allocation2 [shape = 'u8[131072]{0}', space=vmem, size = 0x20000, scoped, tag = 'output window, operand 0']
    #allocation3 [shape = 's32[2]{0}', space=sflag, size = 0x8, scoped, tag = 'scoped memory for tpu_custom_call.1']
    %8 = vsyncpa [#allocation3], 0
    %s9 = scalar_lea.sflag [#allocation3], 1
    %10 = vsyncpa %s9, 0
    loop: start=0, step=1, limit=4
    $region2: #{tpu_custom_call.1} parent=1 // loop_pre_header
      _
    $region3: #{tpu_custom_call.1} parent=1 // loop_header
      %s12 = sphi 0, %s16
      %p13 = scmp.ge.s32.totalorder %s12, 4
      %s22 = sphi 0, %s24
      %s25 = sphi 0, %s22
      %s26 = sphi 0, %s25
      %s42 = sphi 0, %s26
      %s46 = sphi 0, %s46
      %s48 = sphi 0, %s46
      %s49 = sphi 0, %s48
      %s63 = sphi 0, %s49
      %s67 = sphi 0, %s67
      %s69 = sphi 0, %s67
      %s70 = sphi 0, %s69
      %s84 = sphi 0, %s70
      %s90 = sphi 0, %s92
      %s93 = sphi 0, %s90
      %s94 = sphi 0, %s93
      %s110 = sphi 0, %s94
    $region4: #{tpu_custom_call.1} parent=1 // loop_header_branch
      %15 = sbr.rel (%p13) target = $region8
    $region5: #{tpu_custom_call.1} parent=1 // loop_body
      %s17 = ssub.s32 %s12, 1
      %s18 = ssub.s32 %s12, 2
      %s19 = sadd.s32 %s12, 1
      %s20 = ssub.s32 %s12, %s19
      %p21 = scmp.eq.s32.totalorder %s20, 0
      %s23 = sadd.s32 %s22, 1
      %s24 = scalar_select %p21, %s22, %s23
      %p27 = pneg %p21
      %p28 = scmp.eq.s32.totalorder %s12, 1
      %p29 = por %p27, %p28
      %p30 = scmp.ne.s32.totalorder %s22, %s25
      %p31 = scmp.eq.s32.totalorder %s12, 0
      %p32 = por %p30, %p31
      %p33 = scmp.ne.s32.totalorder %s22, %s25
      %p34 = scmp.eq.s32.totalorder %s17, 1
      %p35 = por %p33, %p34
      %p36 = scmp.ne.s32.totalorder %s25, %s26
      %p37 = scmp.eq.s32.totalorder %s17, 0
      %p38 = por %p36, %p37
      %p39 = scmp.ne.s32.totalorder %s25, %s26
      %p40 = scmp.eq.s32.totalorder %s18, 1
      %p41 = por %p39, %p40
      %p43 = scmp.ne.s32.totalorder %s26, %s42
      %p44 = scmp.eq.s32.totalorder %s18, 0
      %p45 = por %p43, %p44
      %s47 = sadd.s32 %s46, 1
      %p50 = scmp.eq.s32.totalorder %s12, 1
      %p51 = scmp.ne.s32.totalorder %s46, %s48
      %p52 = scmp.eq.s32.totalorder %s12, 0
      %p53 = por %p51, %p52
      %p54 = scmp.ne.s32.totalorder %s46, %s48
      %p55 = scmp.eq.s32.totalorder %s17, 1
      %p56 = por %p54, %p55
      %p57 = scmp.ne.s32.totalorder %s48, %s49
      %p58 = scmp.eq.s32.totalorder %s17, 0
      %p59 = por %p57, %p58
      %p60 = scmp.ne.s32.totalorder %s48, %s49
      %p61 = scmp.eq.s32.totalorder %s18, 1
      %p62 = por %p60, %p61
      %p64 = scmp.ne.s32.totalorder %s49, %s63
      %p65 = scmp.eq.s32.totalorder %s18, 0
      %p66 = por %p64, %p65
      %s68 = sadd.s32 %s67, 1
      %p71 = scmp.eq.s32.totalorder %s12, 1
      %p72 = scmp.ne.s32.totalorder %s67, %s69
      %p73 = scmp.eq.s32.totalorder %s12, 0
      %p74 = por %p72, %p73
      %p75 = scmp.ne.s32.totalorder %s67, %s69
      %p76 = scmp.eq.s32.totalorder %s17, 1
      %p77 = por %p75, %p76
      %p78 = scmp.ne.s32.totalorder %s69, %s70
      %p79 = scmp.eq.s32.totalorder %s17, 0
      %p80 = por %p78, %p79
      %p81 = scmp.ne.s32.totalorder %s69, %s70
      %p82 = scmp.eq.s32.totalorder %s18, 1
      %p83 = por %p81, %p82
      %p85 = scmp.ne.s32.totalorder %s70, %s84
      %p86 = scmp.eq.s32.totalorder %s18, 0
      %p87 = por %p85, %p86
      %s88 = ssub.s32 %s12, %s19
      %p89 = scmp.eq.s32.totalorder %s88, 0
      %s91 = sadd.s32 %s90, 1
      %s92 = scalar_select %p89, %s90, %s91
      %p95 = pneg %p89
      %p96 = scmp.eq.s32.totalorder %s12, 1
      %p97 = por %p95, %p96
      %p98 = scmp.ne.s32.totalorder %s90, %s93
      %p99 = scmp.eq.s32.totalorder %s12, 0
      %p100 = por %p98, %p99
      %p101 = scmp.ne.s32.totalorder %s90, %s93
      %p102 = scmp.eq.s32.totalorder %s17, 1
      %p103 = por %p101, %p102
      %p104 = scmp.ne.s32.totalorder %s93, %s94
      %p105 = scmp.eq.s32.totalorder %s17, 0
      %p106 = por %p104, %p105
      %p107 = scmp.ne.s32.totalorder %s93, %s94
      %p108 = scmp.eq.s32.totalorder %s18, 1
      %p109 = por %p107, %p108
      %p111 = scmp.ne.s32.totalorder %s94, %s110
      %p112 = scmp.eq.s32.totalorder %s18, 0
      %p113 = por %p111, %p112
      %p114 = scmp.le.s32.totalorder 1, %s12
      %p115 = scmp.lt.s32.totalorder %s12, 3
      %p116 = pnand %p114, %p115
      %p117 = pneg %p116
      // Predicated region
      $region9: #{tpu_custom_call.1} parent=5 // pred_check
        _
      $region10: #{tpu_custom_call.1} parent=5 // pred_check_branch
        %119 = sbr.rel (%p116) target = $region12
      $region11: #{tpu_custom_call.1} parent=5 // pred_region
        %s120 = ssub.s32 %s12, 1
        // Predicated region
        $region13: #{tpu_custom_call.1} parent=11 // pred_check
          %p121 = pneg %p59
        $region14: #{tpu_custom_call.1} parent=11 // pred_check_branch
          %123 = sbr.rel (%p121) target = $region16
        $region15: #{tpu_custom_call.1} parent=11 // pred_region
          _
        $region16: #{tpu_custom_call.1} parent=11 // pred_fallthru
          _
        // Predicated region
        $region17: #{tpu_custom_call.1} parent=11 // pred_check
          %p124 = pneg %p80
        $region18: #{tpu_custom_call.1} parent=11 // pred_check_branch
          %126 = sbr.rel (%p124) target = $region20
        $region19: #{tpu_custom_call.1} parent=11 // pred_region
          _
        $region20: #{tpu_custom_call.1} parent=11 // pred_fallthru
          _
      $region12: #{tpu_custom_call.1} parent=5 // pred_fallthru
        _
      %p127 = scmp.lt.s32.totalorder %s12, 2
      // Predicated region
      $region21: #{tpu_custom_call.1} parent=5 // pred_check
        %p128 = pneg %p127
      $region22: #{tpu_custom_call.1} parent=5 // pred_check_branch
        %130 = sbr.rel (%p128) target = $region24
      $region23: #{tpu_custom_call.1} parent=5 // pred_region
        // Predicated region
        $region25: #{tpu_custom_call.1} parent=23 // pred_check
          %p131 = pneg %p32
        $region26: #{tpu_custom_call.1} parent=23 // pred_check_branch
          %133 = sbr.rel (%p131) target = $region28
        $region27: #{tpu_custom_call.1} parent=23 // pred_region
          %s134 = smul.u32 16, %s12
          %p135 = scmp.lt.s32.totalorder %s134, 31
          %s136 = scalar_select %p135, %s134, 31
          %s137 = smul.addr %s136, 8
          %s138 = scalar_lea.vmem %s0, %s137
          %s139 = smul.u32 16, %s12
        $region28: #{tpu_custom_call.1} parent=23 // pred_fallthru
          _
      $region24: #{tpu_custom_call.1} parent=5 // pred_fallthru
        _
      %p140 = scmp.le.s32.totalorder 1, %s12
      %p141 = scmp.lt.s32.totalorder %s12, 3
      %p142 = pnand %p140, %p141
      %p143 = pneg %p142
      // Predicated region
      $region29: #{tpu_custom_call.1} parent=5 // pred_check
        _
      $region30: #{tpu_custom_call.1} parent=5 // pred_check_branch
        %145 = sbr.rel (%p142) target = $region32
      $region31: #{tpu_custom_call.1} parent=5 // pred_region
        %s146 = ssub.s32 %s12, 1
        %s147 = smul.u32 16, %s17
        %p148 = scmp.lt.s32.totalorder %s147, 31
        %s149 = scalar_select %p148, %s147, 31
        %s150 = smul.addr %s149, 8
        %s151 = scalar_lea.vmem %s0, %s150
        %p152 = pneg %p38
        %p153 = pneg %p35
        %p154 = pneg %p59
        %p155 = pneg %p56
        %p156 = pneg %p80
        %p157 = pneg %p77
        %p158 = pneg %p106
        %p159 = pneg %p103
        %s160 = sand.u32 %s93, 1
        %s161 = scalar_lea.sflag [#allocation3], %s160
        %s162 = sand.u32 %s93, 1
        %s163 = smul.addr %s162, 128
        %s164 = scalar_lea.vmem [#allocation2], %s163
        %s165 = smul.u32 16, %s17
        %p166 = scmp.lt.s32.totalorder %s165, 31
        %s167 = scalar_select %p166, %s165, 31
        %s168 = smul.addr %s167, 8
        %s169 = scalar_lea.vmem %s0, %s168
        %s170 = smul.u32 16, %s17
        %s171 = smul.u32 16, %s17
        %v172 = vld [vmem:[%s169] sm:$0xff]
        %v173 = vld [vmem:[%s169 + $0x8] sm:$0xff]
        %v174 = vld [vmem:[%s169 + $0x10] sm:$0xff]
        %v175 = vld [vmem:[%s169 + $0x18] sm:$0xff]
        %v176 = vld [vmem:[%s169 + $0x20] sm:$0xff]
        %v177 = vld [vmem:[%s169 + $0x28] sm:$0xff]
        %v178 = vld [vmem:[%s169 + $0x30] sm:$0xff]
        %v179 = vld [vmem:[%s169 + $0x38] sm:$0xff]
        %v180 = vld [vmem:[%s169 + $0x40] sm:$0xff]
        %v181 = vld [vmem:[%s169 + $0x48] sm:$0xff]
        %v182 = vld [vmem:[%s169 + $0x50] sm:$0xff]
        %v183 = vld [vmem:[%s169 + $0x58] sm:$0xff]
        %v184 = vld [vmem:[%s169 + $0x60] sm:$0xff]
        %v185 = vld [vmem:[%s169 + $0x68] sm:$0xff]
        %v186 = vld [vmem:[%s169 + $0x70] sm:$0xff]
        %v187 = vld [vmem:[%s169 + $0x78] sm:$0xff]
        %v188 = vld [vmem:[%s1] sm:$0xff]
        %v189 = vld [vmem:[%s1 + $0x8] sm:$0xff]
        %v190 = vld [vmem:[%s1 + $0x10] sm:$0xff]
        %v191 = vld [vmem:[%s1 + $0x18] sm:$0xff]
        %v192 = vld [vmem:[%s2] sm:$0x1]
        %v193 = vld [vmem:[%s2 + $0x1] sm:$0x1]
        %v194 = vld [vmem:[%s2 + $0x2] sm:$0x1]
        %v195 = vlaneseq
        %v196 = vshrl.u32 %v195, 7
        %v197 = vsub.s32 0, %v196
        %v198 = vrot.slane %v192, %v197
        %vm199 = vcmask 261120
        %v201 = vsel %vm199, %v172, 0
        %v204 = vsel %vm199, %v173, 0
        %v207 = vsel %vm199, %v174, 0
        %v210 = vsel %vm199, %v175, 0
        %v213 = vsel %vm199, %v176, 0
        %v216 = vsel %vm199, %v177, 0
        %v219 = vsel %vm199, %v178, 0
        %v222 = vsel %vm199, %v179, 0
        %v225 = vsel %vm199, %v180, 0
        %v228 = vsel %vm199, %v181, 0
        %v231 = vsel %vm199, %v182, 0
        %v234 = vsel %vm199, %v183, 0
        %v237 = vsel %vm199, %v184, 0
        %v240 = vsel %vm199, %v185, 0
        %v243 = vsel %vm199, %v186, 0
        %v246 = vsel %vm199, %v187, 0
        %248 = vmatprep.subr.mxu0 0.0
        %249 = vmatpush1.msra.mxu0 %v188
        %250 = vmatprep.subr.mxu0 0.0
        %251 = vmatpush1.msra.mxu0 %v189
        %252 = vmatprep.subr.mxu0 0.0
        %253 = vmatpush1.msra.mxu0 %v190
        %254 = vmatprep.subr.mxu0 0.0
        %255 = vmatpush1.msra.mxu0 %v191
        %256 = vmatprep.subr.mxu0 0.0
        %257 = vmatpush1.msra.mxu0 0.0
        %258 = vmatprep.subr.mxu0 0.0
        %259 = vmatpush1.msra.mxu0 0.0
        %260 = vmatprep.subr.mxu0 0.0
        %261 = vmatpush1.msra.mxu0 0.0
        %262 = vmatprep.subr.mxu0 0.0
        %263 = vmatpush1.msra.mxu0 0.0
        %264 = vmatprep.subr.mxu0 0.0
        %265 = vmatpush1.msra.mxu0 0.0
        %266 = vmatprep.subr.mxu0 0.0
        %267 = vmatpush1.msra.mxu0 0.0
        %268 = vmatprep.subr.mxu0 0.0
        %269 = vmatpush1.msra.mxu0 0.0
        %270 = vmatprep.subr.mxu0 0.0
        %271 = vmatpush1.msra.mxu0 0.0
        %272 = vmatprep.subr.mxu0 0.0
        %273 = vmatpush1.msra.mxu0 0.0
        %274 = vmatprep.subr.mxu0 0.0
        %275 = vmatpush1.msra.mxu0 0.0
        %276 = vmatprep.subr.mxu0 0.0
        %277 = vmatpush1.msra.mxu0 0.0
        %278 = vmatprep.subr.mxu0 0.0
        %279 = vmatpush1.msra.mxu0 0.0
        %280 = vmatprep.subr.mxu0 0.0
        %281 = vmatpush1.msra.mxu0 0.0
        %282 = vmatprep.subr.mxu0 0.0
        %283 = vmatpush1.msra.mxu0 0.0
        %284 = vmatprep.subr.mxu0 0.0
        %285 = vmatpush1.msra.mxu0 0.0
        %286 = vmatprep.subr.mxu0 0.0
        %287 = vmatpush1.msra.mxu0 0.0
        %288 = vmatprep.subr.mxu0 0.0
        %289 = vmatpush1.msra.mxu0 0.0
        %290 = vmatprep.subr.mxu0 0.0
        %291 = vmatpush1.msra.mxu0 0.0
        %292 = vmatprep.subr.mxu0 0.0
        %293 = vmatpush1.msra.mxu0 0.0
        %294 = vmatprep.subr.mxu0 0.0
        %295 = vmatpush1.msra.mxu0 0.0
        %296 = vmatprep.subr.mxu0 0.0
        %297 = vmatpush1.msra.mxu0 0.0
        %298 = vmatprep.subr.mxu0 0.0
        %299 = vmatpush1.msra.mxu0 0.0
        %300 = vmatprep.subr.mxu0 0.0
        %301 = vmatpush1.msra.mxu0 0.0
        %302 = vmatprep.subr.mxu0 0.0
        %303 = vmatpush1.msra.mxu0 0.0
        %304 = vmatprep.subr.mxu0 0.0
        %305 = vmatpush1.msra.mxu0 0.0
        %306 = vmatprep.subr.mxu0 0.0
        %307 = vmatpush1.msra.mxu0 0.0
        %308 = vmatprep.subr.mxu0 0.0
        %309 = vmatpush1.msra.mxu0 0.0
        %310 = vmatprep.subr.mxu0 0.0
        %311 = vmatpush1.msra.mxu0 0.0
        %312 = vmatprep.mubr.f32.mxu0 0.0
        %313 = vmatmul.mubr.f32.gmra.mrb[0].mxu0 %v201
        %v314 = vpop.f32.mrb[0].mxu0
        %v315 = vadd.f32 %v198, %v314
        %v316 = vpop.f32.mrb[0].mxu0
        %317 = vmatprep.mubr.f32.mxu0 0.0
        %318 = vmatmul.mubr.f32.gmra.mrb[0].mxu0 %v204
        %v319 = vpop.f32.mrb[0].mxu0
        %v320 = vadd.f32 %v198, %v319
        %v321 = vpop.f32.mrb[0].mxu0
        %322 = vmatprep.mubr.f32.mxu0 0.0
        %323 = vmatmul.mubr.f32.gmra.mrb[0].mxu0 %v207
        %v324 = vpop.f32.mrb[0].mxu0
        %v325 = vadd.f32 %v198, %v324
        %v326 = vpop.f32.mrb[0].mxu0
        %327 = vmatprep.mubr.f32.mxu0 0.0
        %328 = vmatmul.mubr.f32.gmra.mrb[0].mxu0 %v210
        %v329 = vpop.f32.mrb[0].mxu0
        %v330 = vadd.f32 %v198, %v329
        %v331 = vpop.f32.mrb[0].mxu0
        %332 = vmatprep.mubr.f32.mxu0 0.0
        %333 = vmatmul.mubr.f32.gmra.mrb[0].mxu0 %v213
        %v334 = vpop.f32.mrb[0].mxu0
        %v335 = vadd.f32 %v198, %v334
        %v336 = vpop.f32.mrb[0].mxu0
        %337 = vmatprep.mubr.f32.mxu0 0.0
        %338 = vmatmul.mubr.f32.gmra.mrb[0].mxu0 %v216
        %v339 = vpop.f32.mrb[0].mxu0
        %v340 = vadd.f32 %v198, %v339
        %v341 = vpop.f32.mrb[0].mxu0
        %342 = vmatprep.mubr.f32.mxu0 0.0
        %343 = vmatmul.mubr.f32.gmra.mrb[0].mxu0 %v219
        %v344 = vpop.f32.mrb[0].mxu0
        %v345 = vadd.f32 %v198, %v344
        %v346 = vpop.f32.mrb[0].mxu0
        %347 = vmatprep.mubr.f32.mxu0 0.0
        %348 = vmatmul.mubr.f32.gmra.mrb[0].mxu0 %v222
        %v349 = vpop.f32.mrb[0].mxu0
        %v350 = vadd.f32 %v198, %v349
        %v351 = vpop.f32.mrb[0].mxu0
        %352 = vmatprep.mubr.f32.mxu0 0.0
        %353 = vmatmul.mubr.f32.gmra.mrb[0].mxu0 %v225
        %v354 = vpop.f32.mrb[0].mxu0
        %v355 = vadd.f32 %v198, %v354
        %v356 = vpop.f32.mrb[0].mxu0
        %357 = vmatprep.mubr.f32.mxu0 0.0
        %358 = vmatmul.mubr.f32.gmra.mrb[0].mxu0 %v228
        %v359 = vpop.f32.mrb[0].mxu0
        %v360 = vadd.f32 %v198, %v359
        %v361 = vpop.f32.mrb[0].mxu0
        %362 = vmatprep.mubr.f32.mxu0 0.0
        %363 = vmatmul.mubr.f32.gmra.mrb[0].mxu0 %v231
        %v364 = vpop.f32.mrb[0].mxu0
        %v365 = vadd.f32 %v198, %v364
        %v366 = vpop.f32.mrb[0].mxu0
        %367 = vmatprep.mubr.f32.mxu0 0.0
        %368 = vmatmul.mubr.f32.gmra.mrb[0].mxu0 %v234
        %v369 = vpop.f32.mrb[0].mxu0
        %v370 = vadd.f32 %v198, %v369
        %v371 = vpop.f32.mrb[0].mxu0
        %372 = vmatprep.mubr.f32.mxu0 0.0
        %373 = vmatmul.mubr.f32.gmra.mrb[0].mxu0 %v237
        %v374 = vpop.f32.mrb[0].mxu0
        %v375 = vadd.f32 %v198, %v374
        %v376 = vpop.f32.mrb[0].mxu0
        %377 = vmatprep.mubr.f32.mxu0 0.0
        %378 = vmatmul.mubr.f32.gmra.mrb[0].mxu0 %v240
        %v379 = vpop.f32.mrb[0].mxu0
        %v380 = vadd.f32 %v198, %v379
        %v381 = vpop.f32.mrb[0].mxu0
        %382 = vmatprep.mubr.f32.mxu0 0.0
        %383 = vmatmul.mubr.f32.gmra.mrb[0].mxu0 %v243
        %v384 = vpop.f32.mrb[0].mxu0
        %v385 = vadd.f32 %v198, %v384
        %v386 = vpop.f32.mrb[0].mxu0
        %387 = vmatprep.mubr.f32.mxu0 0.0
        %388 = vmatmul.mubr.f32.gmra.mrb[0].mxu0 %v246
        %v389 = vpop.f32.mrb[0].mxu0
        %v390 = vadd.f32 %v198, %v389
        %v391 = vpop.f32.mrb[0].mxu0
        %392 = vdwg.mxu0
        %vm393 = vcmp.gt.f32.partialorder %v315, 20.0
        %vm394 = vcmp.gt.f32.partialorder %v320, 20.0
        %vm395 = vcmp.gt.f32.partialorder %v325, 20.0
        %vm396 = vcmp.gt.f32.partialorder %v330, 20.0
        %vm397 = vcmp.gt.f32.partialorder %v335, 20.0
        %vm398 = vcmp.gt.f32.partialorder %v340, 20.0
        %vm399 = vcmp.gt.f32.partialorder %v345, 20.0
        %vm400 = vcmp.gt.f32.partialorder %v350, 20.0
        %vm401 = vcmp.gt.f32.partialorder %v355, 20.0
        %vm402 = vcmp.gt.f32.partialorder %v360, 20.0
        %vm403 = vcmp.gt.f32.partialorder %v365, 20.0
        %vm404 = vcmp.gt.f32.partialorder %v370, 20.0
        %vm405 = vcmp.gt.f32.partialorder %v375, 20.0
        %vm406 = vcmp.gt.f32.partialorder %v380, 20.0
        %vm407 = vcmp.gt.f32.partialorder %v385, 20.0
        %vm408 = vcmp.gt.f32.partialorder %v390, 20.0
        %v409 = vmin.f32 %v315, 20.0
        %v410 = vmin.f32 %v320, 20.0
        %v411 = vmin.f32 %v325, 20.0
        %v412 = vmin.f32 %v330, 20.0
        %v413 = vmin.f32 %v335, 20.0
        %v414 = vmin.f32 %v340, 20.0
        %v415 = vmin.f32 %v345, 20.0
        %v416 = vmin.f32 %v350, 20.0
        %v417 = vmin.f32 %v355, 20.0
        %v418 = vmin.f32 %v360, 20.0
        %v419 = vmin.f32 %v365, 20.0
        %v420 = vmin.f32 %v370, 20.0
        %v421 = vmin.f32 %v375, 20.0
        %v422 = vmin.f32 %v380, 20.0
        %v423 = vmin.f32 %v385, 20.0
        %v424 = vmin.f32 %v390, 20.0
        %v425 = vmul.f32 %v409, 1.442695
        %v426 = vpow.pop %v425
        %v427 = vmul.f32 %v410, 1.442695
        %v428 = vpow.pop %v427
        %v429 = vmul.f32 %v411, 1.442695
        %v430 = vpow.pop %v429
        %v431 = vmul.f32 %v412, 1.442695
        %v432 = vpow.pop %v431
        %v433 = vmul.f32 %v413, 1.442695
        %v434 = vpow.pop %v433
        %v435 = vmul.f32 %v414, 1.442695
        %v436 = vpow.pop %v435
        %v437 = vmul.f32 %v415, 1.442695
        %v438 = vpow.pop %v437
        %v439 = vmul.f32 %v416, 1.442695
        %v440 = vpow.pop %v439
        %v441 = vmul.f32 %v417, 1.442695
        %v442 = vpow.pop %v441
        %v443 = vmul.f32 %v418, 1.442695
        %v444 = vpow.pop %v443
        %v445 = vmul.f32 %v419, 1.442695
        %v446 = vpow.pop %v445
        %v447 = vmul.f32 %v420, 1.442695
        %v448 = vpow.pop %v447
        %v449 = vmul.f32 %v421, 1.442695
        %v450 = vpow.pop %v449
        %v451 = vmul.f32 %v422, 1.442695
        %v452 = vpow.pop %v451
        %v453 = vmul.f32 %v423, 1.442695
        %v454 = vpow.pop %v453
        %v455 = vmul.f32 %v424, 1.442695
        %v456 = vpow.pop %v455
        %v457 = vadd.f32 %v426, 1.0
        %v458 = vlog2.pop %v457
        %v459 = vmul.f32 %v458, 0.6931472
        %v460 = vmul.f32 -0.5, %v426
        %v461 = vadd.f32 %v460, 1.0
        %v462 = vmul.f32 %v461, %v426
        %v463 = vand.u32 2147483647, %v426
        %vm464 = vcmp.lt.f32.partialorder %v463, 0.0004427343
        %v465 = vsel %vm464, %v462, %v459
        %v466 = vadd.f32 %v428, 1.0
        %v467 = vlog2.pop %v466
        %v468 = vmul.f32 %v467, 0.6931472
        %v469 = vmul.f32 -0.5, %v428
        %v470 = vadd.f32 %v469, 1.0
        %v471 = vmul.f32 %v470, %v428
        %v472 = vand.u32 2147483647, %v428
        %vm473 = vcmp.lt.f32.partialorder %v472, 0.0004427343
        %v474 = vsel %vm473, %v471, %v468
        %v475 = vadd.f32 %v430, 1.0
        %v476 = vlog2.pop %v475
        %v477 = vmul.f32 %v476, 0.6931472
        %v478 = vmul.f32 -0.5, %v430
        %v479 = vadd.f32 %v478, 1.0
        %v480 = vmul.f32 %v479, %v430
        %v481 = vand.u32 2147483647, %v430
        %vm482 = vcmp.lt.f32.partialorder %v481, 0.0004427343
        %v483 = vsel %vm482, %v480, %v477
        %v484 = vadd.f32 %v432, 1.0
        %v485 = vlog2.pop %v484
        %v486 = vmul.f32 %v485, 0.6931472
        %v487 = vmul.f32 -0.5, %v432
        %v488 = vadd.f32 %v487, 1.0
        %v489 = vmul.f32 %v488, %v432
        %v490 = vand.u32 2147483647, %v432
        %vm491 = vcmp.lt.f32.partialorder %v490, 0.0004427343
        %v492 = vsel %vm491, %v489, %v486
        %v493 = vadd.f32 %v434, 1.0
        %v494 = vlog2.pop %v493
        %v495 = vmul.f32 %v494, 0.6931472
        %v496 = vmul.f32 -0.5, %v434
        %v497 = vadd.f32 %v496, 1.0
        %v498 = vmul.f32 %v497, %v434
        %v499 = vand.u32 2147483647, %v434
        %vm500 = vcmp.lt.f32.partialorder %v499, 0.0004427343
        %v501 = vsel %vm500, %v498, %v495
        %v502 = vadd.f32 %v436, 1.0
        %v503 = vlog2.pop %v502
        %v504 = vmul.f32 %v503, 0.6931472
        %v505 = vmul.f32 -0.5, %v436
        %v506 = vadd.f32 %v505, 1.0
        %v507 = vmul.f32 %v506, %v436
        %v508 = vand.u32 2147483647, %v436
        %vm509 = vcmp.lt.f32.partialorder %v508, 0.0004427343
        %v510 = vsel %vm509, %v507, %v504
        %v511 = vadd.f32 %v438, 1.0
        %v512 = vlog2.pop %v511
        %v513 = vmul.f32 %v512, 0.6931472
        %v514 = vmul.f32 -0.5, %v438
        %v515 = vadd.f32 %v514, 1.0
        %v516 = vmul.f32 %v515, %v438
        %v517 = vand.u32 2147483647, %v438
        %vm518 = vcmp.lt.f32.partialorder %v517, 0.0004427343
        %v519 = vsel %vm518, %v516, %v513
        %v520 = vadd.f32 %v440, 1.0
        %v521 = vlog2.pop %v520
        %v522 = vmul.f32 %v521, 0.6931472
        %v523 = vmul.f32 -0.5, %v440
        %v524 = vadd.f32 %v523, 1.0
        %v525 = vmul.f32 %v524, %v440
        %v526 = vand.u32 2147483647, %v440
        %vm527 = vcmp.lt.f32.partialorder %v526, 0.0004427343
        %v528 = vsel %vm527, %v525, %v522
        %v529 = vadd.f32 %v442, 1.0
        %v530 = vlog2.pop %v529
        %v531 = vmul.f32 %v530, 0.6931472
        %v532 = vmul.f32 -0.5, %v442
        %v533 = vadd.f32 %v532, 1.0
        %v534 = vmul.f32 %v533, %v442
        %v535 = vand.u32 2147483647, %v442
        %vm536 = vcmp.lt.f32.partialorder %v535, 0.0004427343
        %v537 = vsel %vm536, %v534, %v531
        %v538 = vadd.f32 %v444, 1.0
        %v539 = vlog2.pop %v538
        %v540 = vmul.f32 %v539, 0.6931472
        %v541 = vmul.f32 -0.5, %v444
        %v542 = vadd.f32 %v541, 1.0
        %v543 = vmul.f32 %v542, %v444
        %v544 = vand.u32 2147483647, %v444
        %vm545 = vcmp.lt.f32.partialorder %v544, 0.0004427343
        %v546 = vsel %vm545, %v543, %v540
        %v547 = vadd.f32 %v446, 1.0
        %v548 = vlog2.pop %v547
        %v549 = vmul.f32 %v548, 0.6931472
        %v550 = vmul.f32 -0.5, %v446
        %v551 = vadd.f32 %v550, 1.0
        %v552 = vmul.f32 %v551, %v446
        %v553 = vand.u32 2147483647, %v446
        %vm554 = vcmp.lt.f32.partialorder %v553, 0.0004427343
        %v555 = vsel %vm554, %v552, %v549
        %v556 = vadd.f32 %v448, 1.0
        %v557 = vlog2.pop %v556
        %v558 = vmul.f32 %v557, 0.6931472
        %v559 = vmul.f32 -0.5, %v448
        %v560 = vadd.f32 %v559, 1.0
        %v561 = vmul.f32 %v560, %v448
        %v562 = vand.u32 2147483647, %v448
        %vm563 = vcmp.lt.f32.partialorder %v562, 0.0004427343
        %v564 = vsel %vm563, %v561, %v558
        %v565 = vadd.f32 %v450, 1.0
        %v566 = vlog2.pop %v565
        %v567 = vmul.f32 %v566, 0.6931472
        %v568 = vmul.f32 -0.5, %v450
        %v569 = vadd.f32 %v568, 1.0
        %v570 = vmul.f32 %v569, %v450
        %v571 = vand.u32 2147483647, %v450
        %vm572 = vcmp.lt.f32.partialorder %v571, 0.0004427343
        %v573 = vsel %vm572, %v570, %v567
        %v574 = vadd.f32 %v452, 1.0
        %v575 = vlog2.pop %v574
        %v576 = vmul.f32 %v575, 0.6931472
        %v577 = vmul.f32 -0.5, %v452
        %v578 = vadd.f32 %v577, 1.0
        %v579 = vmul.f32 %v578, %v452
        %v580 = vand.u32 2147483647, %v452
        %vm581 = vcmp.lt.f32.partialorder %v580, 0.0004427343
        %v582 = vsel %vm581, %v579, %v576
        %v583 = vadd.f32 %v454, 1.0
        %v584 = vlog2.pop %v583
        %v585 = vmul.f32 %v584, 0.6931472
        %v586 = vmul.f32 -0.5, %v454
        %v587 = vadd.f32 %v586, 1.0
        %v588 = vmul.f32 %v587, %v454
        %v589 = vand.u32 2147483647, %v454
        %vm590 = vcmp.lt.f32.partialorder %v589, 0.0004427343
        %v591 = vsel %vm590, %v588, %v585
        %v592 = vadd.f32 %v456, 1.0
        %v593 = vlog2.pop %v592
        %v594 = vmul.f32 %v593, 0.6931472
        %v595 = vmul.f32 -0.5, %v456
        %v596 = vadd.f32 %v595, 1.0
        %v597 = vmul.f32 %v596, %v456
        %v598 = vand.u32 2147483647, %v456
        %vm599 = vcmp.lt.f32.partialorder %v598, 0.0004427343
        %v600 = vsel %vm599, %v597, %v594
        %v601 = vsel %vm393, %v315, %v465
        %v602 = vsel %vm394, %v320, %v474
        %v603 = vsel %vm395, %v325, %v483
        %v604 = vsel %vm396, %v330, %v492
        %v605 = vsel %vm397, %v335, %v501
        %v606 = vsel %vm398, %v340, %v510
        %v607 = vsel %vm399, %v345, %v519
        %v608 = vsel %vm400, %v350, %v528
        %v609 = vsel %vm401, %v355, %v537
        %v610 = vsel %vm402, %v360, %v546
        %v611 = vsel %vm403, %v365, %v555
        %v612 = vsel %vm404, %v370, %v564
        %v613 = vsel %vm405, %v375, %v573
        %v614 = vsel %vm406, %v380, %v582
        %v615 = vsel %vm407, %v385, %v591
        %v616 = vsel %vm408, %v390, %v600
        %v617 = vlaneseq
        %v618 = vshrl.u32 %v617, 7
        %v619 = vsub.s32 0, %v618
        %v620 = vrot.slane %v194, %v619
        %v621 = vadd.f32 %v601, %v620
        %v622 = vadd.f32 %v602, %v620
        %v623 = vadd.f32 %v603, %v620
        %v624 = vadd.f32 %v604, %v620
        %v625 = vadd.f32 %v605, %v620
        %v626 = vadd.f32 %v606, %v620
        %v627 = vadd.f32 %v607, %v620
        %v628 = vadd.f32 %v608, %v620
        %v629 = vadd.f32 %v609, %v620
        %v630 = vadd.f32 %v610, %v620
        %v631 = vadd.f32 %v611, %v620
        %v632 = vadd.f32 %v612, %v620
        %v633 = vadd.f32 %v613, %v620
        %v634 = vadd.f32 %v614, %v620
        %v635 = vadd.f32 %v615, %v620
        %v636 = vadd.f32 %v616, %v620
        %v637 = vsub.f32 %v621, %v315
        %v638 = vsub.f32 %v622, %v320
        %v639 = vsub.f32 %v623, %v325
        %v640 = vsub.f32 %v624, %v330
        %v641 = vsub.f32 %v625, %v335
        %v642 = vsub.f32 %v626, %v340
        %v643 = vsub.f32 %v627, %v345
        %v644 = vsub.f32 %v628, %v350
        %v645 = vsub.f32 %v629, %v355
        %v646 = vsub.f32 %v630, %v360
        %v647 = vsub.f32 %v631, %v365
        %v648 = vsub.f32 %v632, %v370
        %v649 = vsub.f32 %v633, %v375
        %v650 = vsub.f32 %v634, %v380
        %v651 = vsub.f32 %v635, %v385
        %v652 = vsub.f32 %v636, %v390
        %v653 = vlaneseq
        %v654 = vshrl.u32 %v653, 7
        %v655 = vsub.s32 0, %v654
        %v656 = vrot.slane %v193, %v655
        %v657 = vmul.f32 %v656, %v637
        %v658 = vmul.f32 %v656, %v638
        %v659 = vmul.f32 %v656, %v639
        %v660 = vmul.f32 %v656, %v640
        %v661 = vmul.f32 %v656, %v641
        %v662 = vmul.f32 %v656, %v642
        %v663 = vmul.f32 %v656, %v643
        %v664 = vmul.f32 %v656, %v644
        %v665 = vmul.f32 %v656, %v645
        %v666 = vmul.f32 %v656, %v646
        %v667 = vmul.f32 %v656, %v647
        %v668 = vmul.f32 %v656, %v648
        %v669 = vmul.f32 %v656, %v649
        %v670 = vmul.f32 %v656, %v650
        %v671 = vmul.f32 %v656, %v651
        %v672 = vmul.f32 %v656, %v652
        %v673 = vadd.f32 %v315, %v657
        %v674 = vadd.f32 %v320, %v658
        %v675 = vadd.f32 %v325, %v659
        %v676 = vadd.f32 %v330, %v660
        %v677 = vadd.f32 %v335, %v661
        %v678 = vadd.f32 %v340, %v662
        %v679 = vadd.f32 %v345, %v663
        %v680 = vadd.f32 %v350, %v664
        %v681 = vadd.f32 %v355, %v665
        %v682 = vadd.f32 %v360, %v666
        %v683 = vadd.f32 %v365, %v667
        %v684 = vadd.f32 %v370, %v668
        %v685 = vadd.f32 %v375, %v669
        %v686 = vadd.f32 %v380, %v670
        %v687 = vadd.f32 %v385, %v671
        %v688 = vadd.f32 %v390, %v672
        %689 = vst [vmem:[%s164] sm:$0xff] %v673
        %690 = vst [vmem:[%s164 + $0x8] sm:$0xff] %v674
        %691 = vst [vmem:[%s164 + $0x10] sm:$0xff] %v675
        %692 = vst [vmem:[%s164 + $0x18] sm:$0xff] %v676
        %693 = vst [vmem:[%s164 + $0x20] sm:$0xff] %v677
        %694 = vst [vmem:[%s164 + $0x28] sm:$0xff] %v678
        %695 = vst [vmem:[%s164 + $0x30] sm:$0xff] %v679
        %696 = vst [vmem:[%s164 + $0x38] sm:$0xff] %v680
        %697 = vst [vmem:[%s164 + $0x40] sm:$0xff] %v681
        %698 = vst [vmem:[%s164 + $0x48] sm:$0xff] %v682
        %699 = vst [vmem:[%s164 + $0x50] sm:$0xff] %v683
        %700 = vst [vmem:[%s164 + $0x58] sm:$0xff] %v684
        %701 = vst [vmem:[%s164 + $0x60] sm:$0xff] %v685
        %702 = vst [vmem:[%s164 + $0x68] sm:$0xff] %v686
        %703 = vst [vmem:[%s164 + $0x70] sm:$0xff] %v687
        %704 = vst [vmem:[%s164 + $0x78] sm:$0xff] %v688
        %s705 = sand.u32 %s93, 1
        %s706 = scalar_lea.sflag [#allocation3], %s705
        %s707 = sand.u32 %s93, 1
        %s708 = smul.addr %s707, 128
        %s709 = scalar_lea.vmem [#allocation2], %s708
        // Predicated region
        $region33: #{tpu_custom_call.1} parent=31 // pred_check
          %p710 = pneg %p103
        $region34: #{tpu_custom_call.1} parent=31 // pred_check_branch
          %712 = sbr.rel (%p710) target = $region36
        $region35: #{tpu_custom_call.1} parent=31 // pred_region
          %s713 = smul.u32 16, %s17
          %s715 = ssub.s32 2048, 2048
          %716 = vsyncadd %s706, %s715
          %s717 = smul.addr %s713, 128
          %s718 = scalar_lea.hbm %s3, %s717
          %s719 = sshll.u32 %s709, 4
          %s720 = int_to_ptr.vmem [resolvable:$true] %s719
          %725 = dma.vmem_to_hbm [thread:$0]  %s720, 2048, %s718, %s706, 128, 128, 8
        $region36: #{tpu_custom_call.1} parent=31 // pred_fallthru
          _
      $region32: #{tpu_custom_call.1} parent=5 // pred_fallthru
        _
      %p726 = scmp.le.s32.totalorder 2, %s12
      // Predicated region
      $region37: #{tpu_custom_call.1} parent=5 // pred_check
        %p727 = pneg %p726
      $region38: #{tpu_custom_call.1} parent=5 // pred_check_branch
        %729 = sbr.rel (%p727) target = $region40
      $region39: #{tpu_custom_call.1} parent=5 // pred_region
        %s730 = ssub.s32 %s12, 2
        // Predicated region
        $region41: #{tpu_custom_call.1} parent=39 // pred_check
          %p731 = pneg %p109
        $region42: #{tpu_custom_call.1} parent=39 // pred_check_branch
          %733 = sbr.rel (%p731) target = $region44
        $region43: #{tpu_custom_call.1} parent=39 // pred_region
          %s734 = sand.u32 %s94, 1
          %s735 = scalar_lea.sflag [#allocation3], %s734
          %s736 = sand.u32 %s94, 1
          %s737 = smul.addr %s736, 128
          %s738 = scalar_lea.vmem [#allocation2], %s737
          %739 = dma.done %s735, 2048
        $region44: #{tpu_custom_call.1} parent=39 // pred_fallthru
          _
      $region40: #{tpu_custom_call.1} parent=5 // pred_fallthru
        _
    $region6: #{tpu_custom_call.1} parent=1 // loop_footer
      %s16 = sadd.s32 1, %s12
    $region7: #{tpu_custom_call.1} parent=1 // loop_footer_branch
      %11 = sbr.rel target = $region3
    $region8: #{tpu_custom_call.1} parent=1 // loop_exit
      _
    %740 = vsyncpa [#allocation3], 1
    %s741 = scalar_lea.sflag [#allocation3], 1
    %742 = vsyncpa %s741, 1

</llo_original>
